<compile_context>
chip_gen: v7x
topology: tpu7x:2x2x1
jax: 0.10.0
libtpu: 0.0.40
codegen_flags: <defaults>
</compile_context>

<pallas_src>
import functools

import jax
import jax.numpy as jnp
from jax import lax
from jax.experimental import pallas as pl
from jax.experimental.pallas import tpu as pltpu


def _block_attention_kernel(q_ref, k_ref, v_ref, o_ref, *, num_blocks):
    # Block shapes: q (1, T, D), k/v (1, S, D), o (1, T, D)
    q = q_ref[0].astype(jnp.float32)          # (T, D)
    k = k_ref[0].astype(jnp.float32)          # (S, D)
    v = v_ref[0]                              # (S, D) — kept in input dtype for the PV matmul
    D = q.shape[-1]
    hd = D // num_blocks
    scale = float(hd) ** -0.5

    # Static unroll over heads (num_blocks is small); hd==128 keeps every
    # slice lane-aligned and every store unmasked.
    for h in range(num_blocks):
        lo, hi = h * hd, (h + 1) * hd
        qh = q[:, lo:hi] * scale              # (T, hd)
        kh = k[:, lo:hi]                      # (S, hd)
        vh = v[:, lo:hi]                      # (S, hd)

        # scores = qh @ kh.T  -> (T, S), f32 accumulation on the MXU
        s = lax.dot_general(qh, kh, (((1,), (1,)), ((), ())),
                            preferred_element_type=jnp.float32)

        # numerically stable softmax over the source axis
        s = s - jnp.max(s, axis=-1, keepdims=True)
        p = jnp.exp(s)
        p = p / jnp.sum(p, axis=-1, keepdims=True)

        # out_h = softmax(scores) @ vh -> (T, hd)
        oh = jnp.dot(p.astype(vh.dtype), vh, preferred_element_type=jnp.float32)

        # lane-aligned store of this head's slice of the output
        o_ref[0, :, lo:hi] = oh.astype(o_ref.dtype)


def block_attention_forward(q, k, v, num_blocks):
    B, T, D = q.shape
    _, S, _ = k.shape
    assert D % num_blocks == 0, "d_model must be divisible by num_blocks"

    kernel = functools.partial(_block_attention_kernel, num_blocks=num_blocks)

    return pl.pallas_call(
        kernel,
        out_shape=jax.ShapeDtypeStruct((B, T, D), q.dtype),
        grid=(B,),
        in_specs=[pl.BlockSpec((1, T, D), lambda b: (b, 0, 0)),
                  pl.BlockSpec((1, S, D), lambda b: (b, 0, 0)),
                  pl.BlockSpec((1, S, D), lambda b: (b, 0, 0))],
        out_specs=pl.BlockSpec((1, T, D), lambda b: (b, 0, 0)),
        compiler_params=pltpu.CompilerParams(
            dimension_semantics=("parallel",)),
    )(q, k, v)


def block_attention_reference(q, k, v, num_blocks):
    B, T, D = q.shape
    _, S, _ = k.shape
    hd = D // num_blocks
    qh = q.reshape(B, T, num_blocks, hd).transpose(0, 2, 1, 3)  # (B, H, T, hd)
    kh = k.reshape(B, S, num_blocks, hd).transpose(0, 2, 1, 3)  # (B, H, S, hd)
    vh = v.reshape(B, S, num_blocks, hd).transpose(0, 2, 1, 3)  # (B, H, S, hd)
    qh = qh * float(hd) ** -0.5
    attn = jnp.einsum("bhtd,bhsd->bhts", qh, kh)
    attn = jax.nn.softmax(attn, axis=-1)
    out = jnp.einsum("bhts,bhsd->bhtd", attn, vh)
    return out.transpose(0, 2, 1, 3).reshape(B, T, D)


if __name__ == "__main__":
    # Small, TPU-friendly shapes: d_model=256, num_blocks=2 -> head_dim=128
    # (lane-aligned head slices, unmasked stores); grid=(B,) with B=2 pipelines.
    B, T, S, d_model, num_blocks = 2, 64, 64, 256, 2

    key = jax.random.PRNGKey(0)
    kq, kk, kv = jax.random.split(key, 3)
    q = jax.random.normal(kq, (B, T, d_model), jnp.float32)
    k = jax.random.normal(kk, (B, S, d_model), jnp.float32)
    v = jax.random.normal(kv, (B, S, d_model), jnp.float32)

    out = block_attention_forward(q, k, v, num_blocks)
    out = jax.block_until_ready(out)

    ref = block_attention_reference(q, k, v, num_blocks)
    assert out.shape == (B, T, d_model)
    assert jnp.allclose(out, ref, atol=1e-5, rtol=1e-5), "mismatch vs pure-JAX reference"

    print("KERNEL_OK")
</pallas_src>

<mosaic_0001>
module attributes {stable_mosaic.version = 11 : i64} {
  func.func @_block_attention_kernel(%arg0: i32, %arg1: memref<1x64x256xf32, #tpu.memory_space<vmem>>, %arg2: memref<1x64x256xf32, #tpu.memory_space<vmem>>, %arg3: memref<1x64x256xf32, #tpu.memory_space<vmem>>, %arg4: memref<1x64x256xf32, #tpu.memory_space<vmem>>) attributes {dimension_semantics = [#tpu.dimension_semantics<parallel>], iteration_bounds = array<i64: 2>, scalar_prefetch = 0 : i64, scratch_operands = 0 : i64, tpu.core_type = #tpu.core_type<tc>, window_params = [{transform_indices = @transform_0, window_bounds = array<i64: 1, 64, 256>}, {transform_indices = @transform_1, window_bounds = array<i64: 1, 64, 256>}, {transform_indices = @transform_2, window_bounds = array<i64: 1, 64, 256>}, {transform_indices = @transform_3, window_bounds = array<i64: 1, 64, 256>}]} {
    %c0 = arith.constant 0 : index
    %c0_0 = arith.constant 0 : index
    %c0_1 = arith.constant 0 : index
    %0 = vector.load %arg1[%c0, %c0_0, %c0_1] : memref<1x64x256xf32, #tpu.memory_space<vmem>>, vector<1x64x256xf32>
    %1 = vector.shape_cast %0 : vector<1x64x256xf32> to vector<64x256xf32>
    %c0_2 = arith.constant 0 : index
    %c0_3 = arith.constant 0 : index
    %c0_4 = arith.constant 0 : index
    %2 = vector.load %arg2[%c0_2, %c0_3, %c0_4] : memref<1x64x256xf32, #tpu.memory_space<vmem>>, vector<1x64x256xf32>
    %3 = vector.shape_cast %2 : vector<1x64x256xf32> to vector<64x256xf32>
    %c0_5 = arith.constant 0 : index
    %c0_6 = arith.constant 0 : index
    %c0_7 = arith.constant 0 : index
    %4 = vector.load %arg3[%c0_5, %c0_6, %c0_7] : memref<1x64x256xf32, #tpu.memory_space<vmem>>, vector<1x64x256xf32>
    %5 = vector.shape_cast %4 : vector<1x64x256xf32> to vector<64x256xf32>
    %6 = vector.extract_strided_slice %1 {offsets = [0, 0], sizes = [64, 128], strides = [1, 1]} : vector<64x256xf32> to vector<64x128xf32>
    %cst = arith.constant 0.0883883461 : f32
    %7 = vector.broadcast %cst : f32 to vector<64x128xf32>
    %8 = arith.mulf %6, %7 : vector<64x128xf32>
    %9 = vector.extract_strided_slice %3 {offsets = [0, 0], sizes = [64, 128], strides = [1, 1]} : vector<64x256xf32> to vector<64x128xf32>
    %10 = vector.extract_strided_slice %5 {offsets = [0, 0], sizes = [64, 128], strides = [1, 1]} : vector<64x256xf32> to vector<64x128xf32>
    %cst_8 = arith.constant dense<0.000000e+00> : vector<64x64xf32>
    %11 = tpu.matmul %8, %9, %cst_8 {dimension_numbers = #tpu.dot_dimension_numbers<[1], [1], [0], [0], [0, 0, 1, 0], [], []>} : vector<64x128xf32>, vector<64x128xf32>, vector<64x64xf32> -> vector<64x64xf32>
    %cst_9 = arith.constant dense<0xFF800000> : vector<64xf32>
    %12 = vector.multi_reduction <maximumf>, %11, %cst_9 [1] : vector<64x64xf32> to vector<64xf32>
    %13 = vector.shape_cast %12 : vector<64xf32> to vector<64x1xf32>
    %14 = vector.broadcast %13 : vector<64x1xf32> to vector<64x64xf32>
    %15 = arith.subf %11, %14 : vector<64x64xf32>
    %16 = math.exp %15 : vector<64x64xf32>
    %cst_10 = arith.constant dense<0.000000e+00> : vector<64xf32>
    %17 = vector.multi_reduction <add>, %16, %cst_10 [1] : vector<64x64xf32> to vector<64xf32>
    %18 = vector.shape_cast %17 : vector<64xf32> to vector<64x1xf32>
    %19 = vector.broadcast %18 : vector<64x1xf32> to vector<64x64xf32>
    %20 = arith.divf %16, %19 : vector<64x64xf32>
    %cst_11 = arith.constant dense<0.000000e+00> : vector<64x128xf32>
    %21 = tpu.matmul %20, %10, %cst_11 {dimension_numbers = #tpu.dot_dimension_numbers<[1], [0], [0], [1], [0, 0, 1, 1], [], []>} : vector<64x64xf32>, vector<64x128xf32>, vector<64x128xf32> -> vector<64x128xf32>
    %c0_12 = arith.constant 0 : index
    %c0_13 = arith.constant 0 : index
    %c0_14 = arith.constant 0 : index
    %22 = vector.load %arg4[%c0_12, %c0_13, %c0_14] : memref<1x64x256xf32, #tpu.memory_space<vmem>>, vector<1x64x128xf32>
    %23 = vector.shape_cast %22 : vector<1x64x128xf32> to vector<64x128xf32>
    %24 = vector.shape_cast %21 : vector<64x128xf32> to vector<1x64x128xf32>
    tpu.vector_store %arg4[%c0_12, %c0_13, %c0_14], %24 {strides = array<i32>} : memref<1x64x256xf32, #tpu.memory_space<vmem>>, vector<1x64x128xf32>,
    %25 = vector.extract_strided_slice %1 {offsets = [0, 128], sizes = [64, 128], strides = [1, 1]} : vector<64x256xf32> to vector<64x128xf32>
    %cst_15 = arith.constant 0.0883883461 : f32
    %26 = vector.broadcast %cst_15 : f32 to vector<64x128xf32>
    %27 = arith.mulf %25, %26 : vector<64x128xf32>
    %28 = vector.extract_strided_slice %3 {offsets = [0, 128], sizes = [64, 128], strides = [1, 1]} : vector<64x256xf32> to vector<64x128xf32>
    %29 = vector.extract_strided_slice %5 {offsets = [0, 128], sizes = [64, 128], strides = [1, 1]} : vector<64x256xf32> to vector<64x128xf32>
    %cst_16 = arith.constant dense<0.000000e+00> : vector<64x64xf32>
    %30 = tpu.matmul %27, %28, %cst_16 {dimension_numbers = #tpu.dot_dimension_numbers<[1], [1], [0], [0], [0, 0, 1, 0], [], []>} : vector<64x128xf32>, vector<64x128xf32>, vector<64x64xf32> -> vector<64x64xf32>
    %cst_17 = arith.constant dense<0xFF800000> : vector<64xf32>
    %31 = vector.multi_reduction <maximumf>, %30, %cst_17 [1] : vector<64x64xf32> to vector<64xf32>
    %32 = vector.shape_cast %31 : vector<64xf32> to vector<64x1xf32>
    %33 = vector.broadcast %32 : vector<64x1xf32> to vector<64x64xf32>
    %34 = arith.subf %30, %33 : vector<64x64xf32>
    %35 = math.exp %34 : vector<64x64xf32>
    %cst_18 = arith.constant dense<0.000000e+00> : vector<64xf32>
    %36 = vector.multi_reduction <add>, %35, %cst_18 [1] : vector<64x64xf32> to vector<64xf32>
    %37 = vector.shape_cast %36 : vector<64xf32> to vector<64x1xf32>
    %38 = vector.broadcast %37 : vector<64x1xf32> to vector<64x64xf32>
    %39 = arith.divf %35, %38 : vector<64x64xf32>
    %cst_19 = arith.constant dense<0.000000e+00> : vector<64x128xf32>
    %40 = tpu.matmul %39, %29, %cst_19 {dimension_numbers = #tpu.dot_dimension_numbers<[1], [0], [0], [1], [0, 0, 1, 1], [], []>} : vector<64x64xf32>, vector<64x128xf32>, vector<64x128xf32> -> vector<64x128xf32>
    %c0_20 = arith.constant 0 : index
    %c0_21 = arith.constant 0 : index
    %c128 = arith.constant 128 : index
    %41 = vector.load %arg4[%c0_20, %c0_21, %c128] : memref<1x64x256xf32, #tpu.memory_space<vmem>>, vector<1x64x128xf32>
    %42 = vector.shape_cast %41 : vector<1x64x128xf32> to vector<64x128xf32>
    %43 = vector.shape_cast %40 : vector<64x128xf32> to vector<1x64x128xf32>
    tpu.vector_store %arg4[%c0_20, %c0_21, %c128], %43 {strides = array<i32>} : memref<1x64x256xf32, #tpu.memory_space<vmem>>, vector<1x64x128xf32>,
    return
  }
  func.func @transform_0(%arg0: i32) -> (i32, i32, i32) {
    %c0_i32 = arith.constant 0 : i32
    %c0_i32_0 = arith.constant 0 : i32
    %c0_i32_1 = arith.constant 0 : i32
    return %arg0, %c0_i32, %c0_i32_0 : i32, i32, i32
  }
  func.func @transform_1(%arg0: i32) -> (i32, i32, i32) {
    %c0_i32 = arith.constant 0 : i32
    %c0_i32_0 = arith.constant 0 : i32
    %c0_i32_1 = arith.constant 0 : i32
    return %arg0, %c0_i32, %c0_i32_0 : i32, i32, i32
  }
  func.func @transform_2(%arg0: i32) -> (i32, i32, i32) {
    %c0_i32 = arith.constant 0 : i32
    %c0_i32_0 = arith.constant 0 : i32
    %c0_i32_1 = arith.constant 0 : i32
    return %arg0, %c0_i32, %c0_i32_0 : i32, i32, i32
  }
  func.func @transform_3(%arg0: i32) -> (i32, i32, i32) {
    %c0_i32 = arith.constant 0 : i32
    %c0_i32_0 = arith.constant 0 : i32
    %c0_i32_1 = arith.constant 0 : i32
    return %arg0, %c0_i32, %c0_i32_0 : i32, i32, i32
  }
}

</mosaic_0001>

<llo_original>
// kernel: tpu_custom_call.1
$region0: #{tpu_custom_call.1}
  #allocation0 [shape = 'u32[]', space=smem, size = 0x4, offset = 0x4, fixed_abs, tag = 'smem constant byte address 0x4 - core index']
  #allocation1 [shape = 'u32[144,128]{1,0:T(1,128)}', space=vmem, size = 0x12000, scoped, tag = 'internal scratch']
  %s0 = inlined_call_operand.hbm [shape: f32[2,64,256], index: 0, kind: input, shape index: {}]
  %s1 = inlined_call_operand.hbm [shape: f32[2,64,256], index: 1, kind: input, shape index: {}]
  %s2 = inlined_call_operand.hbm [shape: f32[2,64,256], index: 2, kind: input, shape index: {}]
  %s3 = inlined_call_operand.hbm [shape: f32[2,64,256], index: 3, kind: output, shape index: {}]
  %s4 = sld [smem:[#allocation0]]
  $region57: #{tpu_custom_call.1} parent=0
    _
  %s6 = ssub.s32 1, %s4
  %s7 = scalar_select 0, %s6, %s4
  $region1: #{tpu_custom_call.1} parent=0
    #allocation2 [shape = 'u8[131072]{0}', space=vmem, size = 0x20000, scoped, tag = 'input window, operand 0']
    #allocation3 [shape = 's32[2]{0}', space=sflag, size = 0x8, scoped, tag = 'scoped memory for tpu_custom_call.1']
    #allocation4 [shape = 's32[2]{0}', space=sflag, size = 0x8, scoped, tag = 'scoped memory for tpu_custom_call.1']
    #allocation5 [shape = 'u8[131072]{0}', space=vmem, size = 0x20000, scoped, tag = 'input window, operand 1']
    #allocation6 [shape = 's32[2]{0}', space=sflag, size = 0x8, scoped, tag = 'scoped memory for tpu_custom_call.1']
    #allocation7 [shape = 'u8[131072]{0}', space=vmem, size = 0x20000, scoped, tag = 'input window, operand 2']
    #allocation8 [shape = 'u8[131072]{0}', space=vmem, size = 0x20000, scoped, tag = 'output window, operand 0']
    %8 = vsyncpa [#allocation3], 0
    %s9 = scalar_lea.sflag [#allocation3], 1
    %10 = vsyncpa %s9, 0
    %11 = vsyncpa [#allocation6], 0
    %s12 = scalar_lea.sflag [#allocation6], 1
    %13 = vsyncpa %s12, 0
    %14 = vsyncpa [#allocation4], 0
    %s15 = scalar_lea.sflag [#allocation4], 1
    %16 = vsyncpa %s15, 0
    loop: start=0, step=1, limit=4
    $region2: #{tpu_custom_call.1} parent=1 // loop_pre_header
      _
    $region3: #{tpu_custom_call.1} parent=1 // loop_header
      %s18 = sphi 0, %s22
      %p19 = scmp.ge.s32.totalorder %s18, 4
      %s28 = sphi 0, %s30
      %s31 = sphi 0, %s28
      %s32 = sphi 0, %s31
      %s48 = sphi 0, %s32
      %s54 = sphi 0, %s56
      %s57 = sphi 0, %s54
      %s58 = sphi 0, %s57
      %s74 = sphi 0, %s58
      %s80 = sphi 0, %s82
      %s83 = sphi 0, %s80
      %s84 = sphi 0, %s83
      %s100 = sphi 0, %s84
      %s106 = sphi 0, %s108
      %s109 = sphi 0, %s106
      %s110 = sphi 0, %s109
      %s126 = sphi 0, %s110
    $region4: #{tpu_custom_call.1} parent=1 // loop_header_branch
      %21 = sbr.rel (%p19) target = $region8
    $region5: #{tpu_custom_call.1} parent=1 // loop_body
      %s23 = ssub.s32 %s18, 1
      %s24 = ssub.s32 %s18, 2
      %s25 = sadd.s32 %s18, 1
      %s26 = ssub.s32 %s18, %s25
      %p27 = scmp.eq.s32.totalorder %s26, 0
      %s29 = sadd.s32 %s28, 1
      %s30 = scalar_select %p27, %s28, %s29
      %p33 = pneg %p27
      %p34 = scmp.eq.s32.totalorder %s18, 1
      %p35 = por %p33, %p34
      %p36 = scmp.ne.s32.totalorder %s28, %s31
      %p37 = scmp.eq.s32.totalorder %s18, 0
      %p38 = por %p36, %p37
      %p39 = scmp.ne.s32.totalorder %s28, %s31
      %p40 = scmp.eq.s32.totalorder %s23, 1
      %p41 = por %p39, %p40
      %p42 = scmp.ne.s32.totalorder %s31, %s32
      %p43 = scmp.eq.s32.totalorder %s23, 0
      %p44 = por %p42, %p43
      %p45 = scmp.ne.s32.totalorder %s31, %s32
      %p46 = scmp.eq.s32.totalorder %s24, 1
      %p47 = por %p45, %p46
      %p49 = scmp.ne.s32.totalorder %s32, %s48
      %p50 = scmp.eq.s32.totalorder %s24, 0
      %p51 = por %p49, %p50
      %s52 = ssub.s32 %s18, %s25
      %p53 = scmp.eq.s32.totalorder %s52, 0
      %s55 = sadd.s32 %s54, 1
      %s56 = scalar_select %p53, %s54, %s55
      %p59 = pneg %p53
      %p60 = scmp.eq.s32.totalorder %s18, 1
      %p61 = por %p59, %p60
      %p62 = scmp.ne.s32.totalorder %s54, %s57
      %p63 = scmp.eq.s32.totalorder %s18, 0
      %p64 = por %p62, %p63
      %p65 = scmp.ne.s32.totalorder %s54, %s57
      %p66 = scmp.eq.s32.totalorder %s23, 1
      %p67 = por %p65, %p66
      %p68 = scmp.ne.s32.totalorder %s57, %s58
      %p69 = scmp.eq.s32.totalorder %s23, 0
      %p70 = por %p68, %p69
      %p71 = scmp.ne.s32.totalorder %s57, %s58
      %p72 = scmp.eq.s32.totalorder %s24, 1
      %p73 = por %p71, %p72
      %p75 = scmp.ne.s32.totalorder %s58, %s74
      %p76 = scmp.eq.s32.totalorder %s24, 0
      %p77 = por %p75, %p76
      %s78 = ssub.s32 %s18, %s25
      %p79 = scmp.eq.s32.totalorder %s78, 0
      %s81 = sadd.s32 %s80, 1
      %s82 = scalar_select %p79, %s80, %s81
      %p85 = pneg %p79
      %p86 = scmp.eq.s32.totalorder %s18, 1
      %p87 = por %p85, %p86
      %p88 = scmp.ne.s32.totalorder %s80, %s83
      %p89 = scmp.eq.s32.totalorder %s18, 0
      %p90 = por %p88, %p89
      %p91 = scmp.ne.s32.totalorder %s80, %s83
      %p92 = scmp.eq.s32.totalorder %s23, 1
      %p93 = por %p91, %p92
      %p94 = scmp.ne.s32.totalorder %s83, %s84
      %p95 = scmp.eq.s32.totalorder %s23, 0
      %p96 = por %p94, %p95
      %p97 = scmp.ne.s32.totalorder %s83, %s84
      %p98 = scmp.eq.s32.totalorder %s24, 1
      %p99 = por %p97, %p98
      %p101 = scmp.ne.s32.totalorder %s84, %s100
      %p102 = scmp.eq.s32.totalorder %s24, 0
      %p103 = por %p101, %p102
      %s104 = ssub.s32 %s18, %s25
      %p105 = scmp.eq.s32.totalorder %s104, 0
      %s107 = sadd.s32 %s106, 1
      %s108 = scalar_select %p105, %s106, %s107
      %p111 = pneg %p105
      %p112 = scmp.eq.s32.totalorder %s18, 1
      %p113 = por %p111, %p112
      %p114 = scmp.ne.s32.totalorder %s106, %s109
      %p115 = scmp.eq.s32.totalorder %s18, 0
      %p116 = por %p114, %p115
      %p117 = scmp.ne.s32.totalorder %s106, %s109
      %p118 = scmp.eq.s32.totalorder %s23, 1
      %p119 = por %p117, %p118
      %p120 = scmp.ne.s32.totalorder %s109, %s110
      %p121 = scmp.eq.s32.totalorder %s23, 0
      %p122 = por %p120, %p121
      %p123 = scmp.ne.s32.totalorder %s109, %s110
      %p124 = scmp.eq.s32.totalorder %s24, 1
      %p125 = por %p123, %p124
      %p127 = scmp.ne.s32.totalorder %s110, %s126
      %p128 = scmp.eq.s32.totalorder %s24, 0
      %p129 = por %p127, %p128
      %p130 = scmp.le.s32.totalorder 1, %s18
      %p131 = scmp.lt.s32.totalorder %s18, 3
      %p132 = pnand %p130, %p131
      %p133 = pneg %p132
      // Predicated region
      $region9: #{tpu_custom_call.1} parent=5 // pred_check
        _
      $region10: #{tpu_custom_call.1} parent=5 // pred_check_branch
        %135 = sbr.rel (%p132) target = $region12
      $region11: #{tpu_custom_call.1} parent=5 // pred_region
        %s136 = ssub.s32 %s18, 1
      $region12: #{tpu_custom_call.1} parent=5 // pred_fallthru
        _
      %p137 = scmp.lt.s32.totalorder %s18, 2
      // Predicated region
      $region13: #{tpu_custom_call.1} parent=5 // pred_check
        %p138 = pneg %p137
      $region14: #{tpu_custom_call.1} parent=5 // pred_check_branch
        %140 = sbr.rel (%p138) target = $region16
      $region15: #{tpu_custom_call.1} parent=5 // pred_region
        // Predicated region
        $region17: #{tpu_custom_call.1} parent=15 // pred_check
          %p141 = pneg %p38
        $region18: #{tpu_custom_call.1} parent=15 // pred_check_branch
          %143 = sbr.rel (%p141) target = $region20
        $region19: #{tpu_custom_call.1} parent=15 // pred_region
          %s144 = sand.u32 %s28, 1
          %s145 = scalar_lea.sflag [#allocation3], %s144
          %s146 = sand.u32 %s28, 1
          %s147 = smul.addr %s146, 128
          %s148 = scalar_lea.vmem [#allocation2], %s147
          %s150 = ssub.s32 2048, 2048
          %151 = vsyncadd %s145, %s150
          %s152 = smul.addr %s18, 16
          %s153 = smul.addr %s152, 128
          %s154 = scalar_lea.hbm %s0, %s153
          %s155 = sshll.u32 %s148, 4
          %s156 = int_to_ptr.vmem [resolvable:$true] %s155
          %161 = dma.hbm_to_vmem [thread:$0]  %s154, 2048, %s156, %s145, 256, 256, 16
        $region20: #{tpu_custom_call.1} parent=15 // pred_fallthru
          _
        // Predicated region
        $region21: #{tpu_custom_call.1} parent=15 // pred_check
          %p162 = pneg %p64
        $region22: #{tpu_custom_call.1} parent=15 // pred_check_branch
          %164 = sbr.rel (%p162) target = $region24
        $region23: #{tpu_custom_call.1} parent=15 // pred_region
          %s165 = sand.u32 %s18, 1
          %s166 = scalar_lea.sflag [#allocation6], %s165
          %s167 = sand.u32 %s54, 1
          %s168 = smul.addr %s167, 128
          %s169 = scalar_lea.vmem [#allocation5], %s168
          %s171 = ssub.s32 2048, 2048
          %172 = vsyncadd %s166, %s171
          %s173 = smul.addr %s18, 16
          %s174 = smul.addr %s173, 128
          %s175 = scalar_lea.hbm %s1, %s174
          %s176 = sshll.u32 %s169, 4
          %s177 = int_to_ptr.vmem [resolvable:$true] %s176
          %182 = dma.hbm_to_vmem [thread:$0]  %s175, 2048, %s177, %s166, 256, 256, 16
        $region24: #{tpu_custom_call.1} parent=15 // pred_fallthru
          _
        // Predicated region
        $region25: #{tpu_custom_call.1} parent=15 // pred_check
          %p183 = pneg %p90
        $region26: #{tpu_custom_call.1} parent=15 // pred_check_branch
          %185 = sbr.rel (%p183) target = $region28
        $region27: #{tpu_custom_call.1} parent=15 // pred_region
          %s186 = sand.u32 %s18, 1
          %s187 = scalar_lea.sflag [#allocation6], %s186
          %s188 = sand.u32 %s80, 1
          %s189 = smul.addr %s188, 128
          %s190 = scalar_lea.vmem [#allocation7], %s189
          %s192 = ssub.s32 2048, 2048
          %193 = vsyncadd %s187, %s192
          %s194 = smul.addr %s18, 16
          %s195 = smul.addr %s194, 128
          %s196 = scalar_lea.hbm %s2, %s195
          %s197 = sshll.u32 %s190, 4
          %s198 = int_to_ptr.vmem [resolvable:$true] %s197
          %203 = dma.hbm_to_vmem [thread:$0]  %s196, 2048, %s198, %s187, 256, 256, 16
        $region28: #{tpu_custom_call.1} parent=15 // pred_fallthru
          _
      $region16: #{tpu_custom_call.1} parent=5 // pred_fallthru
        _
      %p204 = scmp.le.s32.totalorder 1, %s18
      %p205 = scmp.lt.s32.totalorder %s18, 3
      %p206 = pnand %p204, %p205
      %p207 = pneg %p206
      // Predicated region
      $region29: #{tpu_custom_call.1} parent=5 // pred_check
        _
      $region30: #{tpu_custom_call.1} parent=5 // pred_check_branch
        %209 = sbr.rel (%p206) target = $region32
      $region31: #{tpu_custom_call.1} parent=5 // pred_region
        %s210 = ssub.s32 %s18, 1
        %s211 = sand.u32 %s31, 1
        %s212 = scalar_lea.sflag [#allocation3], %s211
        %s213 = sand.u32 %s31, 1
        %s214 = smul.addr %s213, 128
        %s215 = scalar_lea.vmem [#allocation2], %s214
        // Predicated region
        $region33: #{tpu_custom_call.1} parent=31 // pred_check
          %p216 = pneg %p44
        $region34: #{tpu_custom_call.1} parent=31 // pred_check_branch
          %218 = sbr.rel (%p216) target = $region36
        $region35: #{tpu_custom_call.1} parent=31 // pred_region
          %219 = dma.done %s212, 2048
        $region36: #{tpu_custom_call.1} parent=31 // pred_fallthru
          _
        %s220 = sand.u32 %s23, 1
        %s221 = scalar_lea.sflag [#allocation6], %s220
        %s222 = sand.u32 %s57, 1
        %s223 = smul.addr %s222, 128
        %s224 = scalar_lea.vmem [#allocation5], %s223
        // Predicated region
        $region37: #{tpu_custom_call.1} parent=31 // pred_check
          %p225 = pneg %p70
        $region38: #{tpu_custom_call.1} parent=31 // pred_check_branch
          %227 = sbr.rel (%p225) target = $region40
        $region39: #{tpu_custom_call.1} parent=31 // pred_region
          %228 = dma.done %s221, 2048
        $region40: #{tpu_custom_call.1} parent=31 // pred_fallthru
          _
        %s229 = sand.u32 %s23, 1
        %s230 = scalar_lea.sflag [#allocation6], %s229
        %s231 = sand.u32 %s83, 1
        %s232 = smul.addr %s231, 128
        %s233 = scalar_lea.vmem [#allocation7], %s232
        // Predicated region
        $region41: #{tpu_custom_call.1} parent=31 // pred_check
          %p234 = pneg %p96
        $region42: #{tpu_custom_call.1} parent=31 // pred_check_branch
          %236 = sbr.rel (%p234) target = $region44
        $region43: #{tpu_custom_call.1} parent=31 // pred_region
          %237 = dma.done %s230, 2048
        $region44: #{tpu_custom_call.1} parent=31 // pred_fallthru
          _
        %s238 = sand.u32 %s31, 1
        %s239 = scalar_lea.sflag [#allocation3], %s238
        %s240 = sand.u32 %s31, 1
        %s241 = smul.addr %s240, 128
        %s242 = scalar_lea.vmem [#allocation2], %s241
        %p243 = pneg %p44
        %p244 = pneg %p41
        %s245 = sand.u32 %s23, 1
        %s246 = scalar_lea.sflag [#allocation6], %s245
        %s247 = sand.u32 %s57, 1
        %s248 = smul.addr %s247, 128
        %s249 = scalar_lea.vmem [#allocation5], %s248
        %p250 = pneg %p70
        %p251 = pneg %p67
        %s252 = sand.u32 %s23, 1
        %s253 = scalar_lea.sflag [#allocation6], %s252
        %s254 = sand.u32 %s83, 1
        %s255 = smul.addr %s254, 128
        %s256 = scalar_lea.vmem [#allocation7], %s255
        %p257 = pneg %p96
        %p258 = pneg %p93
        %p259 = pneg %p122
        %p260 = pneg %p119
        %s261 = sand.u32 %s109, 1
        %s262 = scalar_lea.sflag [#allocation4], %s261
        %s263 = sand.u32 %s109, 1
        %s264 = smul.addr %s263, 128
        %s265 = scalar_lea.vmem [#allocation8], %s264
        %v266 = vld [vmem:[%s215] sm:$0xff]
        %v267 = vld [vmem:[%s215 + $0x8] sm:$0xff]
        %v268 = vld [vmem:[%s215 + $0x10] sm:$0xff]
        %v269 = vld [vmem:[%s215 + $0x18] sm:$0xff]
        %v270 = vld [vmem:[%s215 + $0x20] sm:$0xff]
        %v271 = vld [vmem:[%s215 + $0x28] sm:$0xff]
        %v272 = vld [vmem:[%s215 + $0x30] sm:$0xff]
        %v273 = vld [vmem:[%s215 + $0x38] sm:$0xff]
        %v274 = vld [vmem:[%s215 + $0x40] sm:$0xff]
        %v275 = vld [vmem:[%s215 + $0x48] sm:$0xff]
        %v276 = vld [vmem:[%s215 + $0x50] sm:$0xff]
        %v277 = vld [vmem:[%s215 + $0x58] sm:$0xff]
        %v278 = vld [vmem:[%s215 + $0x60] sm:$0xff]
        %v279 = vld [vmem:[%s215 + $0x68] sm:$0xff]
        %v280 = vld [vmem:[%s215 + $0x70] sm:$0xff]
        %v281 = vld [vmem:[%s215 + $0x78] sm:$0xff]
        %v282 = vld [vmem:[%s224] sm:$0xff]
        %v283 = vld [vmem:[%s224 + $0x8] sm:$0xff]
        %v284 = vld [vmem:[%s224 + $0x10] sm:$0xff]
        %v285 = vld [vmem:[%s224 + $0x18] sm:$0xff]
        %v286 = vld [vmem:[%s224 + $0x20] sm:$0xff]
        %v287 = vld [vmem:[%s224 + $0x28] sm:$0xff]
        %v288 = vld [vmem:[%s224 + $0x30] sm:$0xff]
        %v289 = vld [vmem:[%s224 + $0x38] sm:$0xff]
        %v290 = vld [vmem:[%s224 + $0x40] sm:$0xff]
        %v291 = vld [vmem:[%s224 + $0x48] sm:$0xff]
        %v292 = vld [vmem:[%s224 + $0x50] sm:$0xff]
        %v293 = vld [vmem:[%s224 + $0x58] sm:$0xff]
        %v294 = vld [vmem:[%s224 + $0x60] sm:$0xff]
        %v295 = vld [vmem:[%s224 + $0x68] sm:$0xff]
        %v296 = vld [vmem:[%s224 + $0x70] sm:$0xff]
        %v297 = vld [vmem:[%s224 + $0x78] sm:$0xff]
        %v298 = vld [vmem:[%s233] sm:$0xff]
        %v299 = vld [vmem:[%s233 + $0x8] sm:$0xff]
        %v300 = vld [vmem:[%s233 + $0x10] sm:$0xff]
        %v301 = vld [vmem:[%s233 + $0x18] sm:$0xff]
        %v302 = vld [vmem:[%s233 + $0x20] sm:$0xff]
        %v303 = vld [vmem:[%s233 + $0x28] sm:$0xff]
        %v304 = vld [vmem:[%s233 + $0x30] sm:$0xff]
        %v305 = vld [vmem:[%s233 + $0x38] sm:$0xff]
        %v306 = vld [vmem:[%s233 + $0x40] sm:$0xff]
        %v307 = vld [vmem:[%s233 + $0x48] sm:$0xff]
        %v308 = vld [vmem:[%s233 + $0x50] sm:$0xff]
        %v309 = vld [vmem:[%s233 + $0x58] sm:$0xff]
        %v310 = vld [vmem:[%s233 + $0x60] sm:$0xff]
        %v311 = vld [vmem:[%s233 + $0x68] sm:$0xff]
        %v312 = vld [vmem:[%s233 + $0x70] sm:$0xff]
        %v313 = vld [vmem:[%s233 + $0x78] sm:$0xff]
        %v314 = vmul.f32 %v266, 0.088388346
        %v315 = vmul.f32 %v268, 0.088388346
        %v316 = vmul.f32 %v270, 0.088388346
        %v317 = vmul.f32 %v272, 0.088388346
        %v318 = vmul.f32 %v274, 0.088388346
        %v319 = vmul.f32 %v276, 0.088388346
        %v320 = vmul.f32 %v278, 0.088388346
        %v321 = vmul.f32 %v280, 0.088388346
        %322 = vmatprep.subr.mxu0 0.0
        %323 = vmatpush1.xpose.msra.mxu0 %v282
        %324 = vmatprep.subr.mxu0 0.0
        %325 = vmatpush1.xpose.msra.mxu0 %v284
        %326 = vmatprep.subr.mxu0 0.0
        %327 = vmatpush1.xpose.msra.mxu0 %v286
        %328 = vmatprep.subr.mxu0 0.0
        %329 = vmatpush1.xpose.msra.mxu0 %v288
        %330 = vmatprep.subr.mxu0 0.0
        %331 = vmatpush1.xpose.msra.mxu0 %v290
        %332 = vmatprep.subr.mxu0 0.0
        %333 = vmatpush1.xpose.msra.mxu0 %v292
        %334 = vmatprep.subr.mxu0 0.0
        %335 = vmatpush1.xpose.msra.mxu0 %v294
        %336 = vmatprep.subr.mxu0 0.0
        %337 = vmatpush1.xpose.msra.mxu0 %v296
        %338 = vmatprep.subr.mxu0 0.0
        %339 = vmatpush1.xpose.msra.mxu0 0.0
        %340 = vmatprep.subr.mxu0 0.0
        %341 = vmatpush1.xpose.msra.mxu0 0.0
        %342 = vmatprep.subr.mxu0 0.0
        %343 = vmatpush1.xpose.msra.mxu0 0.0
        %344 = vmatprep.subr.mxu0 0.0
        %345 = vmatpush1.xpose.msra.mxu0 0.0
        %346 = vmatprep.subr.mxu0 0.0
        %347 = vmatpush1.xpose.msra.mxu0 0.0
        %348 = vmatprep.subr.mxu0 0.0
        %349 = vmatpush1.xpose.msra.mxu0 0.0
        %350 = vmatprep.subr.mxu0 0.0
        %351 = vmatpush1.xpose.msra.mxu0 0.0
        %352 = vmatprep.subr.mxu0 0.0
        %353 = vmatpush1.xpose.msra.mxu0 0.0
        %354 = vmatprep.subr.mxu0 0.0
        %355 = vmatpush1.xpose.msra.mxu0 0.0
        %356 = vmatprep.subr.mxu0 0.0
        %357 = vmatpush1.xpose.msra.mxu0 0.0
        %358 = vmatprep.subr.mxu0 0.0
        %359 = vmatpush1.xpose.msra.mxu0 0.0
        %360 = vmatprep.subr.mxu0 0.0
        %361 = vmatpush1.xpose.msra.mxu0 0.0
        %362 = vmatprep.subr.mxu0 0.0
        %363 = vmatpush1.xpose.msra.mxu0 0.0
        %364 = vmatprep.subr.mxu0 0.0
        %365 = vmatpush1.xpose.msra.mxu0 0.0
        %366 = vmatprep.subr.mxu0 0.0
        %367 = vmatpush1.xpose.msra.mxu0 0.0
        %368 = vmatprep.subr.mxu0 0.0
        %369 = vmatpush1.xpose.msra.mxu0 0.0
        %370 = vmatprep.subr.mxu0 0.0
        %371 = vmatpush1.xpose.msra.mxu0 0.0
        %372 = vmatprep.subr.mxu0 0.0
        %373 = vmatpush1.xpose.msra.mxu0 0.0
        %374 = vmatprep.subr.mxu0 0.0
        %375 = vmatpush1.xpose.msra.mxu0 0.0
        %376 = vmatprep.subr.mxu0 0.0
        %377 = vmatpush1.xpose.msra.mxu0 0.0
        %378 = vmatprep.subr.mxu0 0.0
        %379 = vmatpush1.xpose.msra.mxu0 0.0
        %380 = vmatprep.subr.mxu0 0.0
        %381 = vmatpush1.xpose.msra.mxu0 0.0
        %382 = vmatprep.subr.mxu0 0.0
        %383 = vmatpush1.xpose.msra.mxu0 0.0
        %384 = vmatprep.subr.mxu0 0.0
        %385 = vmatpush1.xpose.msra.mxu0 0.0
        %386 = vmatprep.mubr.f32.mxu0 0.0
        %387 = vmatmul.mubr.f32.gmra.mrb[0].mxu0 %v314
        %v388 = vpop.f32.mrb[0].mxu0
        %v389 = vadd.f32 0.0, %v388
        %v390 = vpop.f32.mrb[0].mxu0
        %391 = vmatprep.mubr.f32.mxu0 0.0
        %392 = vmatmul.mubr.f32.gmra.mrb[0].mxu0 %v315
        %v393 = vpop.f32.mrb[0].mxu0
        %v394 = vadd.f32 0.0, %v393
        %v395 = vpop.f32.mrb[0].mxu0
        %396 = vmatprep.mubr.f32.mxu0 0.0
        %397 = vmatmul.mubr.f32.gmra.mrb[0].mxu0 %v316
        %v398 = vpop.f32.mrb[0].mxu0
        %v399 = vadd.f32 0.0, %v398
        %v400 = vpop.f32.mrb[0].mxu0
        %401 = vmatprep.mubr.f32.mxu0 0.0
        %402 = vmatmul.mubr.f32.gmra.mrb[0].mxu0 %v317
        %v403 = vpop.f32.mrb[0].mxu0
        %v404 = vadd.f32 0.0, %v403
        %v405 = vpop.f32.mrb[0].mxu0
        %406 = vmatprep.mubr.f32.mxu0 0.0
        %407 = vmatmul.mubr.f32.gmra.mrb[0].mxu0 %v318
        %v408 = vpop.f32.mrb[0].mxu0
        %v409 = vadd.f32 0.0, %v408
        %v410 = vpop.f32.mrb[0].mxu0
        %411 = vmatprep.mubr.f32.mxu0 0.0
        %412 = vmatmul.mubr.f32.gmra.mrb[0].mxu0 %v319
        %v413 = vpop.f32.mrb[0].mxu0
        %v414 = vadd.f32 0.0, %v413
        %v415 = vpop.f32.mrb[0].mxu0
        %416 = vmatprep.mubr.f32.mxu0 0.0
        %417 = vmatmul.mubr.f32.gmra.mrb[0].mxu0 %v320
        %v418 = vpop.f32.mrb[0].mxu0
        %v419 = vadd.f32 0.0, %v418
        %v420 = vpop.f32.mrb[0].mxu0
        %421 = vmatprep.mubr.f32.mxu0 0.0
        %422 = vmatmul.mubr.f32.gmra.mrb[0].mxu0 %v321
        %v423 = vpop.f32.mrb[0].mxu0
        %v424 = vadd.f32 0.0, %v423
        %v425 = vpop.f32.mrb[0].mxu0
        %426 = vdwg.mxu0
        %vm427 = vcmask 523264
        %v428 = vsel %vm427, %v389, -inf
        %429 = vmax.xlane.f32.xlu0 %v428
        %v430 = vpop.xlane.xlu0 %429
        %v431 = vsel %vm427, %v394, -inf
        %432 = vmax.xlane.f32.xlu0 %v431
        %v433 = vpop.xlane.xlu0 %432
        %v434 = vsel %vm427, %v399, -inf
        %435 = vmax.xlane.f32.xlu0 %v434
        %v436 = vpop.xlane.xlu0 %435
        %v437 = vsel %vm427, %v404, -inf
        %438 = vmax.xlane.f32.xlu0 %v437
        %v439 = vpop.xlane.xlu0 %438
        %v440 = vsel %vm427, %v409, -inf
        %441 = vmax.xlane.f32.xlu0 %v440
        %v442 = vpop.xlane.xlu0 %441
        %v443 = vsel %vm427, %v414, -inf
        %444 = vmax.xlane.f32.xlu0 %v443
        %v445 = vpop.xlane.xlu0 %444
        %v446 = vsel %vm427, %v419, -inf
        %447 = vmax.xlane.f32.xlu0 %v446
        %v448 = vpop.xlane.xlu0 %447
        %v449 = vsel %vm427, %v424, -inf
        %450 = vmax.xlane.f32.xlu0 %v449
        %v451 = vpop.xlane.xlu0 %450
        %v452 = vsub.f32 %v389, %v430
        %v453 = vsub.f32 %v394, %v433
        %v454 = vsub.f32 %v399, %v436
        %v455 = vsub.f32 %v404, %v439
        %v456 = vsub.f32 %v409, %v442
        %v457 = vsub.f32 %v414, %v445
        %v458 = vsub.f32 %v419, %v448
        %v459 = vsub.f32 %v424, %v451
        %v460 = vmul.f32 %v452, 1.442695
        %v461 = vpow.pop %v460
        %v462 = vmul.f32 %v453, 1.442695
        %v463 = vpow.pop %v462
        %v464 = vmul.f32 %v454, 1.442695
        %v465 = vpow.pop %v464
        %v466 = vmul.f32 %v455, 1.442695
        %v467 = vpow.pop %v466
        %v468 = vmul.f32 %v456, 1.442695
        %v469 = vpow.pop %v468
        %v470 = vmul.f32 %v457, 1.442695
        %v471 = vpow.pop %v470
        %v472 = vmul.f32 %v458, 1.442695
        %v473 = vpow.pop %v472
        %v474 = vmul.f32 %v459, 1.442695
        %v475 = vpow.pop %v474
        %v476 = vsel %vm427, %v461, 0.0
        %477 = vadd.xlane.f32.xlu0 %v476
        %v478 = vpop.xlane.xlu0 %477
        %v479 = vsel %vm427, %v463, 0.0
        %480 = vadd.xlane.f32.xlu0 %v479
        %v481 = vpop.xlane.xlu0 %480
        %v482 = vsel %vm427, %v465, 0.0
        %483 = vadd.xlane.f32.xlu0 %v482
        %v484 = vpop.xlane.xlu0 %483
        %v485 = vsel %vm427, %v467, 0.0
        %486 = vadd.xlane.f32.xlu0 %v485
        %v487 = vpop.xlane.xlu0 %486
        %v488 = vsel %vm427, %v469, 0.0
        %489 = vadd.xlane.f32.xlu0 %v488
        %v490 = vpop.xlane.xlu0 %489
        %v491 = vsel %vm427, %v471, 0.0
        %492 = vadd.xlane.f32.xlu0 %v491
        %v493 = vpop.xlane.xlu0 %492
        %v494 = vsel %vm427, %v473, 0.0
        %495 = vadd.xlane.f32.xlu0 %v494
        %v496 = vpop.xlane.xlu0 %495
        %v497 = vsel %vm427, %v475, 0.0
        %498 = vadd.xlane.f32.xlu0 %v497
        %v499 = vpop.xlane.xlu0 %498
        %v500 = vrcp.pop %v478
        %v501 = vmul.f32 %v461, %v500
        %v502 = vrcp.pop %v481
        %v503 = vmul.f32 %v463, %v502
        %v504 = vrcp.pop %v484
        %v505 = vmul.f32 %v465, %v504
        %v506 = vrcp.pop %v487
        %v507 = vmul.f32 %v467, %v506
        %v508 = vrcp.pop %v490
        %v509 = vmul.f32 %v469, %v508
        %v510 = vrcp.pop %v493
        %v511 = vmul.f32 %v471, %v510
        %v512 = vrcp.pop %v496
        %v513 = vmul.f32 %v473, %v512
        %v514 = vrcp.pop %v499
        %v515 = vmul.f32 %v475, %v514
        %v517 = vsel %vm427, %v501, 0
        %v520 = vsel %vm427, %v503, 0
        %v523 = vsel %vm427, %v505, 0
        %v526 = vsel %vm427, %v507, 0
        %v529 = vsel %vm427, %v509, 0
        %v532 = vsel %vm427, %v511, 0
        %v535 = vsel %vm427, %v513, 0
        %v538 = vsel %vm427, %v515, 0
        %540 = vmatprep.subr.mxu0 0.0
        %541 = vmatpush1.msra.mxu0 %v298
        %542 = vmatprep.subr.mxu0 0.0
        %543 = vmatpush1.msra.mxu0 %v300
        %544 = vmatprep.subr.mxu0 0.0
        %545 = vmatpush1.msra.mxu0 %v302
        %546 = vmatprep.subr.mxu0 0.0
        %547 = vmatpush1.msra.mxu0 %v304
        %548 = vmatprep.subr.mxu0 0.0
        %549 = vmatpush1.msra.mxu0 %v306
        %550 = vmatprep.subr.mxu0 0.0
        %551 = vmatpush1.msra.mxu0 %v308
        %552 = vmatprep.subr.mxu0 0.0
        %553 = vmatpush1.msra.mxu0 %v310
        %554 = vmatprep.subr.mxu0 0.0
        %555 = vmatpush1.msra.mxu0 %v312
        %556 = vmatprep.subr.mxu0 0.0
        %557 = vmatpush1.msra.mxu0 0.0
        %558 = vmatprep.subr.mxu0 0.0
        %559 = vmatpush1.msra.mxu0 0.0
        %560 = vmatprep.subr.mxu0 0.0
        %561 = vmatpush1.msra.mxu0 0.0
        %562 = vmatprep.subr.mxu0 0.0
        %563 = vmatpush1.msra.mxu0 0.0
        %564 = vmatprep.subr.mxu0 0.0
        %565 = vmatpush1.msra.mxu0 0.0
        %566 = vmatprep.subr.mxu0 0.0
        %567 = vmatpush1.msra.mxu0 0.0
        %568 = vmatprep.subr.mxu0 0.0
        %569 = vmatpush1.msra.mxu0 0.0
        %570 = vmatprep.subr.mxu0 0.0
        %571 = vmatpush1.msra.mxu0 0.0
        %572 = vmatprep.subr.mxu0 0.0
        %573 = vmatpush1.msra.mxu0 0.0
        %574 = vmatprep.subr.mxu0 0.0
        %575 = vmatpush1.msra.mxu0 0.0
        %576 = vmatprep.subr.mxu0 0.0
        %577 = vmatpush1.msra.mxu0 0.0
        %578 = vmatprep.subr.mxu0 0.0
        %579 = vmatpush1.msra.mxu0 0.0
        %580 = vmatprep.subr.mxu0 0.0
        %581 = vmatpush1.msra.mxu0 0.0
        %582 = vmatprep.subr.mxu0 0.0
        %583 = vmatpush1.msra.mxu0 0.0
        %584 = vmatprep.subr.mxu0 0.0
        %585 = vmatpush1.msra.mxu0 0.0
        %586 = vmatprep.subr.mxu0 0.0
        %587 = vmatpush1.msra.mxu0 0.0
        %588 = vmatprep.subr.mxu0 0.0
        %589 = vmatpush1.msra.mxu0 0.0
        %590 = vmatprep.subr.mxu0 0.0
        %591 = vmatpush1.msra.mxu0 0.0
        %592 = vmatprep.subr.mxu0 0.0
        %593 = vmatpush1.msra.mxu0 0.0
        %594 = vmatprep.subr.mxu0 0.0
        %595 = vmatpush1.msra.mxu0 0.0
        %596 = vmatprep.subr.mxu0 0.0
        %597 = vmatpush1.msra.mxu0 0.0
        %598 = vmatprep.subr.mxu0 0.0
        %599 = vmatpush1.msra.mxu0 0.0
        %600 = vmatprep.subr.mxu0 0.0
        %601 = vmatpush1.msra.mxu0 0.0
        %602 = vmatprep.subr.mxu0 0.0
        %603 = vmatpush1.msra.mxu0 0.0
        %604 = vmatprep.mubr.f32.mxu0 0.0
        %605 = vmatmul.mubr.f32.gmra.mrb[0].mxu0 %v517
        %v606 = vpop.f32.mrb[0].mxu0
        %v607 = vadd.f32 0.0, %v606
        %v608 = vpop.f32.mrb[0].mxu0
        %609 = vmatprep.mubr.f32.mxu0 0.0
        %610 = vmatmul.mubr.f32.gmra.mrb[0].mxu0 %v520
        %v611 = vpop.f32.mrb[0].mxu0
        %v612 = vadd.f32 0.0, %v611
        %v613 = vpop.f32.mrb[0].mxu0
        %614 = vmatprep.mubr.f32.mxu0 0.0
        %615 = vmatmul.mubr.f32.gmra.mrb[0].mxu0 %v523
        %v616 = vpop.f32.mrb[0].mxu0
        %v617 = vadd.f32 0.0, %v616
        %v618 = vpop.f32.mrb[0].mxu0
        %619 = vmatprep.mubr.f32.mxu0 0.0
        %620 = vmatmul.mubr.f32.gmra.mrb[0].mxu0 %v526
        %v621 = vpop.f32.mrb[0].mxu0
        %v622 = vadd.f32 0.0, %v621
        %v623 = vpop.f32.mrb[0].mxu0
        %624 = vmatprep.mubr.f32.mxu0 0.0
        %625 = vmatmul.mubr.f32.gmra.mrb[0].mxu0 %v529
        %v626 = vpop.f32.mrb[0].mxu0
        %v627 = vadd.f32 0.0, %v626
        %v628 = vpop.f32.mrb[0].mxu0
        %629 = vmatprep.mubr.f32.mxu0 0.0
        %630 = vmatmul.mubr.f32.gmra.mrb[0].mxu0 %v532
        %v631 = vpop.f32.mrb[0].mxu0
        %v632 = vadd.f32 0.0, %v631
        %v633 = vpop.f32.mrb[0].mxu0
        %634 = vmatprep.mubr.f32.mxu0 0.0
        %635 = vmatmul.mubr.f32.gmra.mrb[0].mxu0 %v535
        %v636 = vpop.f32.mrb[0].mxu0
        %v637 = vadd.f32 0.0, %v636
        %v638 = vpop.f32.mrb[0].mxu0
        %639 = vmatprep.mubr.f32.mxu0 0.0
        %640 = vmatmul.mubr.f32.gmra.mrb[0].mxu0 %v538
        %v641 = vpop.f32.mrb[0].mxu0
        %v642 = vadd.f32 0.0, %v641
        %v643 = vpop.f32.mrb[0].mxu0
        %644 = vdwg.mxu0
        %645 = vst [vmem:[%s265] sm:$0xff] %v607
        %646 = vst [vmem:[%s265 + $0x10] sm:$0xff] %v612
        %647 = vst [vmem:[%s265 + $0x20] sm:$0xff] %v617
        %648 = vst [vmem:[%s265 + $0x30] sm:$0xff] %v622
        %649 = vst [vmem:[%s265 + $0x40] sm:$0xff] %v627
        %650 = vst [vmem:[%s265 + $0x50] sm:$0xff] %v632
        %651 = vst [vmem:[%s265 + $0x60] sm:$0xff] %v637
        %652 = vst [vmem:[%s265 + $0x70] sm:$0xff] %v642
        %v653 = vmul.f32 %v267, 0.088388346
        %v654 = vmul.f32 %v269, 0.088388346
        %v655 = vmul.f32 %v271, 0.088388346
        %v656 = vmul.f32 %v273, 0.088388346
        %v657 = vmul.f32 %v275, 0.088388346
        %v658 = vmul.f32 %v277, 0.088388346
        %v659 = vmul.f32 %v279, 0.088388346
        %v660 = vmul.f32 %v281, 0.088388346
        %661 = vmatprep.subr.mxu0 0.0
        %662 = vmatpush1.xpose.msra.mxu0 %v283
        %663 = vmatprep.subr.mxu0 0.0
        %664 = vmatpush1.xpose.msra.mxu0 %v285
        %665 = vmatprep.subr.mxu0 0.0
        %666 = vmatpush1.xpose.msra.mxu0 %v287
        %667 = vmatprep.subr.mxu0 0.0
        %668 = vmatpush1.xpose.msra.mxu0 %v289
        %669 = vmatprep.subr.mxu0 0.0
        %670 = vmatpush1.xpose.msra.mxu0 %v291
        %671 = vmatprep.subr.mxu0 0.0
        %672 = vmatpush1.xpose.msra.mxu0 %v293
        %673 = vmatprep.subr.mxu0 0.0
        %674 = vmatpush1.xpose.msra.mxu0 %v295
        %675 = vmatprep.subr.mxu0 0.0
        %676 = vmatpush1.xpose.msra.mxu0 %v297
        %677 = vmatprep.subr.mxu0 0.0
        %678 = vmatpush1.xpose.msra.mxu0 0.0
        %679 = vmatprep.subr.mxu0 0.0
        %680 = vmatpush1.xpose.msra.mxu0 0.0
        %681 = vmatprep.subr.mxu0 0.0
        %682 = vmatpush1.xpose.msra.mxu0 0.0
        %683 = vmatprep.subr.mxu0 0.0
        %684 = vmatpush1.xpose.msra.mxu0 0.0
        %685 = vmatprep.subr.mxu0 0.0
        %686 = vmatpush1.xpose.msra.mxu0 0.0
        %687 = vmatprep.subr.mxu0 0.0
        %688 = vmatpush1.xpose.msra.mxu0 0.0
        %689 = vmatprep.subr.mxu0 0.0
        %690 = vmatpush1.xpose.msra.mxu0 0.0
        %691 = vmatprep.subr.mxu0 0.0
        %692 = vmatpush1.xpose.msra.mxu0 0.0
        %693 = vmatprep.subr.mxu0 0.0
        %694 = vmatpush1.xpose.msra.mxu0 0.0
        %695 = vmatprep.subr.mxu0 0.0
        %696 = vmatpush1.xpose.msra.mxu0 0.0
        %697 = vmatprep.subr.mxu0 0.0
        %698 = vmatpush1.xpose.msra.mxu0 0.0
        %699 = vmatprep.subr.mxu0 0.0
        %700 = vmatpush1.xpose.msra.mxu0 0.0
        %701 = vmatprep.subr.mxu0 0.0
        %702 = vmatpush1.xpose.msra.mxu0 0.0
        %703 = vmatprep.subr.mxu0 0.0
        %704 = vmatpush1.xpose.msra.mxu0 0.0
        %705 = vmatprep.subr.mxu0 0.0
        %706 = vmatpush1.xpose.msra.mxu0 0.0
        %707 = vmatprep.subr.mxu0 0.0
        %708 = vmatpush1.xpose.msra.mxu0 0.0
        %709 = vmatprep.subr.mxu0 0.0
        %710 = vmatpush1.xpose.msra.mxu0 0.0
        %711 = vmatprep.subr.mxu0 0.0
        %712 = vmatpush1.xpose.msra.mxu0 0.0
        %713 = vmatprep.subr.mxu0 0.0
        %714 = vmatpush1.xpose.msra.mxu0 0.0
        %715 = vmatprep.subr.mxu0 0.0
        %716 = vmatpush1.xpose.msra.mxu0 0.0
        %717 = vmatprep.subr.mxu0 0.0
        %718 = vmatpush1.xpose.msra.mxu0 0.0
        %719 = vmatprep.subr.mxu0 0.0
        %720 = vmatpush1.xpose.msra.mxu0 0.0
        %721 = vmatprep.subr.mxu0 0.0
        %722 = vmatpush1.xpose.msra.mxu0 0.0
        %723 = vmatprep.subr.mxu0 0.0
        %724 = vmatpush1.xpose.msra.mxu0 0.0
        %725 = vmatprep.mubr.f32.mxu0 0.0
        %726 = vmatmul.mubr.f32.gmra.mrb[0].mxu0 %v653
        %v727 = vpop.f32.mrb[0].mxu0
        %v728 = vadd.f32 0.0, %v727
        %v729 = vpop.f32.mrb[0].mxu0
        %730 = vmatprep.mubr.f32.mxu0 0.0
        %731 = vmatmul.mubr.f32.gmra.mrb[0].mxu0 %v654
        %v732 = vpop.f32.mrb[0].mxu0
        %v733 = vadd.f32 0.0, %v732
        %v734 = vpop.f32.mrb[0].mxu0
        %735 = vmatprep.mubr.f32.mxu0 0.0
        %736 = vmatmul.mubr.f32.gmra.mrb[0].mxu0 %v655
        %v737 = vpop.f32.mrb[0].mxu0
        %v738 = vadd.f32 0.0, %v737
        %v739 = vpop.f32.mrb[0].mxu0
        %740 = vmatprep.mubr.f32.mxu0 0.0
        %741 = vmatmul.mubr.f32.gmra.mrb[0].mxu0 %v656
        %v742 = vpop.f32.mrb[0].mxu0
        %v743 = vadd.f32 0.0, %v742
        %v744 = vpop.f32.mrb[0].mxu0
        %745 = vmatprep.mubr.f32.mxu0 0.0
        %746 = vmatmul.mubr.f32.gmra.mrb[0].mxu0 %v657
        %v747 = vpop.f32.mrb[0].mxu0
        %v748 = vadd.f32 0.0, %v747
        %v749 = vpop.f32.mrb[0].mxu0
        %750 = vmatprep.mubr.f32.mxu0 0.0
        %751 = vmatmul.mubr.f32.gmra.mrb[0].mxu0 %v658
        %v752 = vpop.f32.mrb[0].mxu0
        %v753 = vadd.f32 0.0, %v752
        %v754 = vpop.f32.mrb[0].mxu0
        %755 = vmatprep.mubr.f32.mxu0 0.0
        %756 = vmatmul.mubr.f32.gmra.mrb[0].mxu0 %v659
        %v757 = vpop.f32.mrb[0].mxu0
        %v758 = vadd.f32 0.0, %v757
        %v759 = vpop.f32.mrb[0].mxu0
        %760 = vmatprep.mubr.f32.mxu0 0.0
        %761 = vmatmul.mubr.f32.gmra.mrb[0].mxu0 %v660
        %v762 = vpop.f32.mrb[0].mxu0
        %v763 = vadd.f32 0.0, %v762
        %v764 = vpop.f32.mrb[0].mxu0
        %765 = vdwg.mxu0
        %v766 = vsel %vm427, %v728, -inf
        %767 = vmax.xlane.f32.xlu0 %v766
        %v768 = vpop.xlane.xlu0 %767
        %v769 = vsel %vm427, %v733, -inf
        %770 = vmax.xlane.f32.xlu0 %v769
        %v771 = vpop.xlane.xlu0 %770
        %v772 = vsel %vm427, %v738, -inf
        %773 = vmax.xlane.f32.xlu0 %v772
        %v774 = vpop.xlane.xlu0 %773
        %v775 = vsel %vm427, %v743, -inf
        %776 = vmax.xlane.f32.xlu0 %v775
        %v777 = vpop.xlane.xlu0 %776
        %v778 = vsel %vm427, %v748, -inf
        %779 = vmax.xlane.f32.xlu0 %v778
        %v780 = vpop.xlane.xlu0 %779
        %v781 = vsel %vm427, %v753, -inf
        %782 = vmax.xlane.f32.xlu0 %v781
        %v783 = vpop.xlane.xlu0 %782
        %v784 = vsel %vm427, %v758, -inf
        %785 = vmax.xlane.f32.xlu0 %v784
        %v786 = vpop.xlane.xlu0 %785
        %v787 = vsel %vm427, %v763, -inf
        %788 = vmax.xlane.f32.xlu0 %v787
        %v789 = vpop.xlane.xlu0 %788
        %v790 = vsub.f32 %v728, %v768
        %v791 = vsub.f32 %v733, %v771
        %v792 = vsub.f32 %v738, %v774
        %v793 = vsub.f32 %v743, %v777
        %v794 = vsub.f32 %v748, %v780
        %v795 = vsub.f32 %v753, %v783
        %v796 = vsub.f32 %v758, %v786
        %v797 = vsub.f32 %v763, %v789
        %v798 = vmul.f32 %v790, 1.442695
        %v799 = vpow.pop %v798
        %v800 = vmul.f32 %v791, 1.442695
        %v801 = vpow.pop %v800
        %v802 = vmul.f32 %v792, 1.442695
        %v803 = vpow.pop %v802
        %v804 = vmul.f32 %v793, 1.442695
        %v805 = vpow.pop %v804
        %v806 = vmul.f32 %v794, 1.442695
        %v807 = vpow.pop %v806
        %v808 = vmul.f32 %v795, 1.442695
        %v809 = vpow.pop %v808
        %v810 = vmul.f32 %v796, 1.442695
        %v811 = vpow.pop %v810
        %v812 = vmul.f32 %v797, 1.442695
        %v813 = vpow.pop %v812
        %v814 = vsel %vm427, %v799, 0.0
        %815 = vadd.xlane.f32.xlu0 %v814
        %v816 = vpop.xlane.xlu0 %815
        %v817 = vsel %vm427, %v801, 0.0
        %818 = vadd.xlane.f32.xlu0 %v817
        %v819 = vpop.xlane.xlu0 %818
        %v820 = vsel %vm427, %v803, 0.0
        %821 = vadd.xlane.f32.xlu0 %v820
        %v822 = vpop.xlane.xlu0 %821
        %v823 = vsel %vm427, %v805, 0.0
        %824 = vadd.xlane.f32.xlu0 %v823
        %v825 = vpop.xlane.xlu0 %824
        %v826 = vsel %vm427, %v807, 0.0
        %827 = vadd.xlane.f32.xlu0 %v826
        %v828 = vpop.xlane.xlu0 %827
        %v829 = vsel %vm427, %v809, 0.0
        %830 = vadd.xlane.f32.xlu0 %v829
        %v831 = vpop.xlane.xlu0 %830
        %v832 = vsel %vm427, %v811, 0.0
        %833 = vadd.xlane.f32.xlu0 %v832
        %v834 = vpop.xlane.xlu0 %833
        %v835 = vsel %vm427, %v813, 0.0
        %836 = vadd.xlane.f32.xlu0 %v835
        %v837 = vpop.xlane.xlu0 %836
        %v838 = vrcp.pop %v816
        %v839 = vmul.f32 %v799, %v838
        %v840 = vrcp.pop %v819
        %v841 = vmul.f32 %v801, %v840
        %v842 = vrcp.pop %v822
        %v843 = vmul.f32 %v803, %v842
        %v844 = vrcp.pop %v825
        %v845 = vmul.f32 %v805, %v844
        %v846 = vrcp.pop %v828
        %v847 = vmul.f32 %v807, %v846
        %v848 = vrcp.pop %v831
        %v849 = vmul.f32 %v809, %v848
        %v850 = vrcp.pop %v834
        %v851 = vmul.f32 %v811, %v850
        %v852 = vrcp.pop %v837
        %v853 = vmul.f32 %v813, %v852
        %v855 = vsel %vm427, %v839, 0
        %v858 = vsel %vm427, %v841, 0
        %v861 = vsel %vm427, %v843, 0
        %v864 = vsel %vm427, %v845, 0
        %v867 = vsel %vm427, %v847, 0
        %v870 = vsel %vm427, %v849, 0
        %v873 = vsel %vm427, %v851, 0
        %v876 = vsel %vm427, %v853, 0
        %878 = vmatprep.subr.mxu0 0.0
        %879 = vmatpush1.msra.mxu0 %v299
        %880 = vmatprep.subr.mxu0 0.0
        %881 = vmatpush1.msra.mxu0 %v301
        %882 = vmatprep.subr.mxu0 0.0
        %883 = vmatpush1.msra.mxu0 %v303
        %884 = vmatprep.subr.mxu0 0.0
        %885 = vmatpush1.msra.mxu0 %v305
        %886 = vmatprep.subr.mxu0 0.0
        %887 = vmatpush1.msra.mxu0 %v307
        %888 = vmatprep.subr.mxu0 0.0
        %889 = vmatpush1.msra.mxu0 %v309
        %890 = vmatprep.subr.mxu0 0.0
        %891 = vmatpush1.msra.mxu0 %v311
        %892 = vmatprep.subr.mxu0 0.0
        %893 = vmatpush1.msra.mxu0 %v313
        %894 = vmatprep.subr.mxu0 0.0
        %895 = vmatpush1.msra.mxu0 0.0
        %896 = vmatprep.subr.mxu0 0.0
        %897 = vmatpush1.msra.mxu0 0.0
        %898 = vmatprep.subr.mxu0 0.0
        %899 = vmatpush1.msra.mxu0 0.0
        %900 = vmatprep.subr.mxu0 0.0
        %901 = vmatpush1.msra.mxu0 0.0
        %902 = vmatprep.subr.mxu0 0.0
        %903 = vmatpush1.msra.mxu0 0.0
        %904 = vmatprep.subr.mxu0 0.0
        %905 = vmatpush1.msra.mxu0 0.0
        %906 = vmatprep.subr.mxu0 0.0
        %907 = vmatpush1.msra.mxu0 0.0
        %908 = vmatprep.subr.mxu0 0.0
        %909 = vmatpush1.msra.mxu0 0.0
        %910 = vmatprep.subr.mxu0 0.0
        %911 = vmatpush1.msra.mxu0 0.0
        %912 = vmatprep.subr.mxu0 0.0
        %913 = vmatpush1.msra.mxu0 0.0
        %914 = vmatprep.subr.mxu0 0.0
        %915 = vmatpush1.msra.mxu0 0.0
        %916 = vmatprep.subr.mxu0 0.0
        %917 = vmatpush1.msra.mxu0 0.0
        %918 = vmatprep.subr.mxu0 0.0
        %919 = vmatpush1.msra.mxu0 0.0
        %920 = vmatprep.subr.mxu0 0.0
        %921 = vmatpush1.msra.mxu0 0.0
        %922 = vmatprep.subr.mxu0 0.0
        %923 = vmatpush1.msra.mxu0 0.0
        %924 = vmatprep.subr.mxu0 0.0
        %925 = vmatpush1.msra.mxu0 0.0
        %926 = vmatprep.subr.mxu0 0.0
        %927 = vmatpush1.msra.mxu0 0.0
        %928 = vmatprep.subr.mxu0 0.0
        %929 = vmatpush1.msra.mxu0 0.0
        %930 = vmatprep.subr.mxu0 0.0
        %931 = vmatpush1.msra.mxu0 0.0
        %932 = vmatprep.subr.mxu0 0.0
        %933 = vmatpush1.msra.mxu0 0.0
        %934 = vmatprep.subr.mxu0 0.0
        %935 = vmatpush1.msra.mxu0 0.0
        %936 = vmatprep.subr.mxu0 0.0
        %937 = vmatpush1.msra.mxu0 0.0
        %938 = vmatprep.subr.mxu0 0.0
        %939 = vmatpush1.msra.mxu0 0.0
        %940 = vmatprep.subr.mxu0 0.0
        %941 = vmatpush1.msra.mxu0 0.0
        %942 = vmatprep.mubr.f32.mxu0 0.0
        %943 = vmatmul.mubr.f32.gmra.mrb[0].mxu0 %v855
        %v944 = vpop.f32.mrb[0].mxu0
        %v945 = vadd.f32 0.0, %v944
        %v946 = vpop.f32.mrb[0].mxu0
        %947 = vmatprep.mubr.f32.mxu0 0.0
        %948 = vmatmul.mubr.f32.gmra.mrb[0].mxu0 %v858
        %v949 = vpop.f32.mrb[0].mxu0
        %v950 = vadd.f32 0.0, %v949
        %v951 = vpop.f32.mrb[0].mxu0
        %952 = vmatprep.mubr.f32.mxu0 0.0
        %953 = vmatmul.mubr.f32.gmra.mrb[0].mxu0 %v861
        %v954 = vpop.f32.mrb[0].mxu0
        %v955 = vadd.f32 0.0, %v954
        %v956 = vpop.f32.mrb[0].mxu0
        %957 = vmatprep.mubr.f32.mxu0 0.0
        %958 = vmatmul.mubr.f32.gmra.mrb[0].mxu0 %v864
        %v959 = vpop.f32.mrb[0].mxu0
        %v960 = vadd.f32 0.0, %v959
        %v961 = vpop.f32.mrb[0].mxu0
        %962 = vmatprep.mubr.f32.mxu0 0.0
        %963 = vmatmul.mubr.f32.gmra.mrb[0].mxu0 %v867
        %v964 = vpop.f32.mrb[0].mxu0
        %v965 = vadd.f32 0.0, %v964
        %v966 = vpop.f32.mrb[0].mxu0
        %967 = vmatprep.mubr.f32.mxu0 0.0
        %968 = vmatmul.mubr.f32.gmra.mrb[0].mxu0 %v870
        %v969 = vpop.f32.mrb[0].mxu0
        %v970 = vadd.f32 0.0, %v969
        %v971 = vpop.f32.mrb[0].mxu0
        %972 = vmatprep.mubr.f32.mxu0 0.0
        %973 = vmatmul.mubr.f32.gmra.mrb[0].mxu0 %v873
        %v974 = vpop.f32.mrb[0].mxu0
        %v975 = vadd.f32 0.0, %v974
        %v976 = vpop.f32.mrb[0].mxu0
        %977 = vmatprep.mubr.f32.mxu0 0.0
        %978 = vmatmul.mubr.f32.gmra.mrb[0].mxu0 %v876
        %v979 = vpop.f32.mrb[0].mxu0
        %v980 = vadd.f32 0.0, %v979
        %v981 = vpop.f32.mrb[0].mxu0
        %982 = vdwg.mxu0
        %983 = vst [vmem:[%s265 + $0x8] sm:$0xff] %v945
        %984 = vst [vmem:[%s265 + $0x18] sm:$0xff] %v950
        %985 = vst [vmem:[%s265 + $0x28] sm:$0xff] %v955
        %986 = vst [vmem:[%s265 + $0x38] sm:$0xff] %v960
        %987 = vst [vmem:[%s265 + $0x48] sm:$0xff] %v965
        %988 = vst [vmem:[%s265 + $0x58] sm:$0xff] %v970
        %989 = vst [vmem:[%s265 + $0x68] sm:$0xff] %v975
        %990 = vst [vmem:[%s265 + $0x78] sm:$0xff] %v980
        %s991 = sand.u32 %s109, 1
        %s992 = scalar_lea.sflag [#allocation4], %s991
        %s993 = sand.u32 %s109, 1
        %s994 = smul.addr %s993, 128
        %s995 = scalar_lea.vmem [#allocation8], %s994
        // Predicated region
        $region45: #{tpu_custom_call.1} parent=31 // pred_check
          %p996 = pneg %p119
        $region46: #{tpu_custom_call.1} parent=31 // pred_check_branch
          %998 = sbr.rel (%p996) target = $region48
        $region47: #{tpu_custom_call.1} parent=31 // pred_region
          %s1000 = ssub.s32 2048, 2048
          %1001 = vsyncadd %s992, %s1000
          %s1002 = smul.addr %s23, 16
          %s1003 = smul.addr %s1002, 128
          %s1004 = scalar_lea.hbm %s3, %s1003
          %s1005 = sshll.u32 %s995, 4
          %s1006 = int_to_ptr.vmem [resolvable:$true] %s1005
          %1011 = dma.vmem_to_hbm [thread:$0]  %s1006, 2048, %s1004, %s992, 256, 256, 16
        $region48: #{tpu_custom_call.1} parent=31 // pred_fallthru
          _
      $region32: #{tpu_custom_call.1} parent=5 // pred_fallthru
        _
      %p1012 = scmp.le.s32.totalorder 2, %s18
      // Predicated region
      $region49: #{tpu_custom_call.1} parent=5 // pred_check
        %p1013 = pneg %p1012
      $region50: #{tpu_custom_call.1} parent=5 // pred_check_branch
        %1015 = sbr.rel (%p1013) target = $region52
      $region51: #{tpu_custom_call.1} parent=5 // pred_region
        %s1016 = ssub.s32 %s18, 2
        // Predicated region
        $region53: #{tpu_custom_call.1} parent=51 // pred_check
          %p1017 = pneg %p125
        $region54: #{tpu_custom_call.1} parent=51 // pred_check_branch
          %1019 = sbr.rel (%p1017) target = $region56
        $region55: #{tpu_custom_call.1} parent=51 // pred_region
          %s1020 = sand.u32 %s110, 1
          %s1021 = scalar_lea.sflag [#allocation4], %s1020
          %s1022 = sand.u32 %s110, 1
          %s1023 = smul.addr %s1022, 128
          %s1024 = scalar_lea.vmem [#allocation8], %s1023
          %1025 = dma.done %s1021, 2048
        $region56: #{tpu_custom_call.1} parent=51 // pred_fallthru
          _
      $region52: #{tpu_custom_call.1} parent=5 // pred_fallthru
        _
    $region6: #{tpu_custom_call.1} parent=1 // loop_footer
      %s22 = sadd.s32 1, %s18
    $region7: #{tpu_custom_call.1} parent=1 // loop_footer_branch
      %17 = sbr.rel target = $region3
    $region8: #{tpu_custom_call.1} parent=1 // loop_exit
      _
    %1026 = vsyncpa [#allocation3], 1
    %s1027 = scalar_lea.sflag [#allocation3], 1
    %1028 = vsyncpa %s1027, 1
    %1029 = vsyncpa [#allocation6], 1
    %s1030 = scalar_lea.sflag [#allocation6], 1
    %1031 = vsyncpa %s1030, 1
    %1032 = vsyncpa [#allocation4], 1
    %s1033 = scalar_lea.sflag [#allocation4], 1
    %1034 = vsyncpa %s1033, 1

</llo_original>
